<compile_context>
chip_gen: v5e
topology: v5e:2x2
jax: 0.10.0
libtpu: 0.0.40
codegen_flags: <defaults>
</compile_context>

<pallas_src>
import functools

import jax
import jax.numpy as jnp
from jax.experimental import pallas as pl
from jax.experimental.pallas import tpu as pltpu


def _overlap_loss_kernel(x_ref, out_ref, thr_ref, acc_ref, *, kp, thr,
                         lane_rows, tile_lr, chunk_lr, blocks_per_core,
                         compute_dtype):
    """One (tile_lr, 128) lane-dense block -> accumulate the penalty sum."""
    c = pl.program_id(0)
    i = pl.program_id(1)

    @pl.when(i == 0)
    def _init():
        # Threshold vector: thr at packed-row-start lanes, +inf elsewhere so
        # the clamp zeroes wrapped / non-row-aligned lanes.  Built once per
        # core segment (JAX does not CSE broadcast_in_dim across grid steps).
        lane = jax.lax.broadcasted_iota(jnp.int32, (1, 128), 1)
        thr_ref[...] = jnp.where(lane % kp == 0, jnp.float32(thr),
                                 jnp.float32(jnp.inf))
        acc_ref[...] = jnp.zeros_like(acc_ref)

    # Logical lane-row offset of this grid step.  The DMA block index is
    # clamped in the index_map, but a clamped block is always fully masked
    # below (its logical offset is past lane_rows), so redundant data is never
    # accumulated.
    block_base = (c * blocks_per_core + i) * tile_lr

    def process(off, cl):
        x = x_ref[pl.ds(off, cl), :].astype(compute_dtype)      # (cl, 128)
        s = jnp.where(x > 0.5, x, jnp.zeros_like(x))             # x * (x > 0.5)

        # Exact within-lane segment sum over each packed row of `kp` lanes:
        # after log2(kp) shift+adds every row-start lane holds its row's sum.
        # jnp.roll keeps the kernel runnable under the TPU interpret mode as
        # well; on hardware pltpu.roll(s, shift=128 - d, axis=1) is the
        # single-op XLU rotate equivalent.
        d = 1
        while d < kp:
            s = s + jnp.roll(s, -d, axis=1)
            d *= 2

        penalty = jnp.maximum(s.astype(jnp.float32) - thr_ref[...], 0.0)

        rows_left = lane_rows - (block_base + off)   # valid lane-rows at `off`

        @pl.when(rows_left >= cl)                    # fast path: chunk fully valid
        def _full():
            acc_ref[...] += jnp.sum(penalty.reshape(cl // 8, 8, 128), axis=0)

        @pl.when(jnp.logical_and(rows_left > 0, rows_left < cl))
        def _tail():                                 # mask rows past the input
            r = jax.lax.broadcasted_iota(jnp.int32, (cl, 128), 0)
            masked = jnp.where(r < rows_left, penalty, 0.0)
            acc_ref[...] += jnp.sum(masked.reshape(cl // 8, 8, 128), axis=0)
        # rows_left <= 0: fully out-of-range (clamped) block -> accumulate nothing.

    n_full = tile_lr // chunk_lr
    rem = tile_lr - n_full * chunk_lr
    if n_full == 1:
        process(0, chunk_lr)                         # statically inlined
    else:
        def body(j, carry):
            process(j * chunk_lr, chunk_lr)
            return carry
        jax.lax.fori_loop(0, n_full, body, 0)
    if rem:                                          # rem is a multiple of 8
        process(n_full * chunk_lr, rem)

    @pl.when(i == pl.num_programs(1) - 1)
    def _finalize():
        # Single cross-lane/sublane reduction per core segment.
        out_ref[...] = jnp.sum(acc_ref[...], keepdims=True)


def _round_up(x, m):
    return ((x + m - 1) // m) * m


def _tpu_generation_defaults():
    """(per-buffer DMA block bytes, TensorCores per chip) for the local TPU."""
    try:
        kind = jax.devices()[0].device_kind.lower()
    except Exception:
        kind = ""
    if "v7" in kind or "7x" in kind:
        # v7x: 64 MiB physical / 32 MiB scoped VMEM per core -> 2x8 MiB
        # double-buffered input is safe; 2 TensorCores per chip.
        return 8 * 1024 * 1024, 2
    if "v6" in kind:
        # v6e: 32 MiB scoped default, 1 TC; 8 MiB blocks amortize step overhead.
        return 8 * 1024 * 1024, 1
    # v5e (16 MiB scoped default) and anything unrecognized: stay small.
    return 2 * 1024 * 1024, 1


def overlap_loss(occupancy_pre_union, *, overlap_threshold, scale,
                 target_block_bytes=None, compute_dtype=jnp.float32):
    """Pallas implementation of OverlapLoss.forward.  Returns a f32 scalar.

    compute_dtype: dtype of the compare/select + shift-add chain.  f32 (default)
      matches the reference exactly; jnp.bfloat16 halves VALU cost for bf16
      inputs on v6e/v7x at a small precision cost in the per-row partial sums.
    """
    B, N, K = occupancy_pre_union.shape
    rows = B * N
    if K > 128:
        # TODO(synk): K > 128 (row wider than one vreg) needs a two-level
        # in-lane reduction; not required for this module's shapes.
        raise NotImplementedError("overlap_loss Pallas kernel assumes K <= 128")

    # int() truncation matches the PyTorch reference.
    thr = float(int(K / overlap_threshold))

    # Pad K to a power of two so each packed row owns exactly one kp-lane group
    # (kp divides 128 by construction -- the roll-window invariant).
    kp = int(pl.next_power_of_2(max(K, 1)))
    assert kp <= 128 and 128 % kp == 0
    g = 128 // kp                                    # packed rows per lane row
    lane_rows = pl.cdiv(rows, g)                     # 128-wide rows after packing

    x2d = occupancy_pre_union.reshape(rows, K)
    itemsize = x2d.dtype.itemsize

    # Single fused pad, only when the zero-copy reshape is impossible (K not a
    # power of two and/or rows % g != 0).  For the common power-of-two K with
    # rows % g == 0 this is skipped entirely -> exactly one HBM read of the
    # input.  (If K is routinely non-power-of-two, repack at the producer: the
    # pad costs one extra HBM round trip plus (kp-K)/kp wasted lanes.)
    pad_rows = lane_rows * g - rows
    if kp != K or pad_rows:
        x2d = jnp.pad(x2d, ((0, pad_rows), (0, kp - K)))
    x_packed = x2d.reshape(lane_rows, 128)

    # All-zero padded rows each contribute max(0 - thr, 0); corrected
    # analytically so the (unusual) thr < 0 case stays exact.
    pad_penalty = pad_rows * max(-thr, 0.0)

    # ---- tiling -----------------------------------------------------------
    block_bytes, cores_per_chip = _tpu_generation_defaults()
    if target_block_bytes is not None:
        block_bytes = target_block_bytes
    row_mult = 8 * (4 // itemsize)        # sublane packing: f32 8, bf16 16, i8 32
    max_tile_lr = max(row_mult,
                      (block_bytes // (128 * itemsize)) // row_mult * row_mult)

    natural_blocks = pl.cdiv(lane_rows, max_tile_lr)
    min_split_lr = max(2 * row_mult,
                       min(max_tile_lr // 2, _round_up(1024, row_mult)))
    if natural_blocks >= 2:
        num_cores = 2          # already multi-block: leading split is free
    elif cores_per_chip >= 2 and lane_rows >= min_split_lr:
        num_cores = 2          # force a 2-way split so both v7x TCs stream HBM
    else:
        num_cores = 1

    n_blocks = _round_up(max(natural_blocks, num_cores), num_cores)
    tile_lr = min(max_tile_lr,
                  _round_up(pl.cdiv(lane_rows, n_blocks), row_mult))
    blocks_per_core = n_blocks // num_cores

    # Clamp the DMA block index so a (rare) fully-out-of-range trailing block
    # re-reads an in-range tile instead of reading past the array; the kernel
    # masks it to zero via its logical (unclamped) offset.
    last_block = max((lane_rows - 1) // tile_lr, 0)

    # Inner accumulation chunk: keeps per-chunk intermediates <= ~0.5 MiB so
    # large DMA blocks never inflate VMEM with full-block temporaries.
    chunk_lr = min(tile_lr, 512)

    kernel = functools.partial(
        _overlap_loss_kernel, kp=kp, thr=thr, lane_rows=lane_rows,
        tile_lr=tile_lr, chunk_lr=chunk_lr, blocks_per_core=blocks_per_core,
        compute_dtype=compute_dtype)

    partials = pl.pallas_call(
        kernel,
        out_shape=jax.ShapeDtypeStruct((num_cores, 1, 1), jnp.float32),
        grid_spec=pltpu.PrefetchScalarGridSpec(
            num_scalar_prefetch=0,
            grid=(num_cores, blocks_per_core),
            in_specs=[
                pl.BlockSpec(
                    (tile_lr, 128),
                    lambda c, i: (jnp.minimum(c * blocks_per_core + i,
                                              last_block), 0)),
            ],
            out_specs=pl.BlockSpec((None, 1, 1), lambda c, i: (c, 0, 0)),
            scratch_shapes=[pltpu.VMEM((1, 128), jnp.float32),   # thr vector
                            pltpu.VMEM((8, 128), jnp.float32)],  # accumulator
        ),
        compiler_params=pltpu.CompilerParams(
            dimension_semantics=("parallel", "arbitrary"),
        ),
    )(x_packed)

    total = jnp.sum(partials) - pad_penalty
    return total * (scale / rows)


def overlap_loss_ref(x, *, overlap_threshold, scale):
    """Pure-JAX reference mirroring the PyTorch module."""
    B, N, K = x.shape
    mask = (x > 0.5).astype(jnp.float32)
    num = jnp.sum(x.astype(jnp.float32) * mask, axis=2)
    pen = jnp.maximum(num - int(K / overlap_threshold), 0.0)
    return scale * jnp.mean(pen)


if __name__ == "__main__":
    overlap_threshold = 2.0
    scale_overlap_loss = 0.5

    # Primary config matching the module: (B, N, K) = (2, 256, 8).
    B, N, K = 2, 256, 8
    x = jax.random.uniform(jax.random.PRNGKey(0), (B, N, K), dtype=jnp.float32)
    loss = jax.block_until_ready(
        overlap_loss(x, overlap_threshold=overlap_threshold,
                     scale=scale_overlap_loss))
    ref = overlap_loss_ref(x, overlap_threshold=overlap_threshold,
                           scale=scale_overlap_loss)
    assert jnp.allclose(loss, ref, rtol=1e-4, atol=1e-6), (loss, ref)

    # Awkward shape: exercises the fused K-pad (5 -> 8) / row-pad and the
    # in-kernel tail mask (partial last block, no wrapper tile padding).
    x2 = jax.random.uniform(jax.random.PRNGKey(1), (3, 100, 5),
                            dtype=jnp.float32)
    l2 = jax.block_until_ready(
        overlap_loss(x2, overlap_threshold=1.5, scale=0.25))
    r2 = overlap_loss_ref(x2, overlap_threshold=1.5, scale=0.25)
    assert jnp.allclose(l2, r2, rtol=1e-4, atol=1e-6), (l2, r2)

    # Multi-block + dual-core path: a small target block forces grid = (2, 2).
    x3 = jax.random.uniform(jax.random.PRNGKey(2), (2, 4096, 8),
                            dtype=jnp.float32)
    l3 = jax.block_until_ready(
        overlap_loss(x3, overlap_threshold=2.0, scale=0.5,
                     target_block_bytes=64 * 1024))
    r3 = overlap_loss_ref(x3, overlap_threshold=2.0, scale=0.5)
    assert jnp.allclose(l3, r3, rtol=1e-4, atol=1e-6), (l3, r3)

    print("KERNEL_OK")
</pallas_src>

<mosaic_0001>
module attributes {stable_mosaic.version = 11 : i64} {
  func.func @_overlap_loss_kernel(%arg0: i32, %arg1: i32, %arg2: memref<32x128xf32, #tpu.memory_space<vmem>>, %arg3: memref<1x1x1xf32, #tpu.memory_space<vmem>>, %arg4: memref<1x128xf32, #tpu.memory_space<vmem>>, %arg5: memref<8x128xf32, #tpu.memory_space<vmem>>) attributes {dimension_semantics = [#tpu.dimension_semantics<parallel>, #tpu.dimension_semantics<arbitrary>], iteration_bounds = array<i64: 1, 1>, scalar_prefetch = 0 : i64, scratch_operands = 2 : i64, tpu.core_type = #tpu.core_type<tc>, window_params = [{transform_indices = @transform_0, window_bounds = array<i64: 32, 128>}, {transform_indices = @transform_1, window_bounds = array<i64: 1, 1, 1>}]} {
    %c0_i32 = arith.constant 0 : i32
    %0 = arith.cmpi eq, %arg1, %c0_i32 : i32
    %1 = arith.extui %0 : i1 to i32
    %c0_i32_0 = arith.constant 0 : i32
    %2 = arith.cmpi ne, %1, %c0_i32_0 : i32
    scf.if %2 {
      %41 = tpu.iota {dimensions = array<i32: 1>} : vector<1x128xi32>
      %c8_i32 = arith.constant 8 : i32
      %c0_i32_15 = arith.constant 0 : i32
      %42 = arith.cmpi eq, %c8_i32, %c0_i32_15 : i32
      %c1_i32_16 = arith.constant 1 : i32
      %43 = arith.select %42, %c1_i32_16, %c8_i32 : i32
      %44 = vector.broadcast %43 : i32 to vector<1x128xi32>
      %45 = arith.remsi %41, %44 : vector<1x128xi32>
      %c0_i32_17 = arith.constant 0 : i32
      %46 = vector.broadcast %c0_i32_17 : i32 to vector<1x128xi32>
      %47 = arith.cmpi ne, %45, %46 : vector<1x128xi32>
      %c0_i32_18 = arith.constant 0 : i32
      %48 = vector.broadcast %c0_i32_18 : i32 to vector<1x128xi32>
      %49 = arith.cmpi slt, %45, %48 : vector<1x128xi32>
      %c0_i32_19 = arith.constant 0 : i32
      %50 = arith.cmpi slt, %43, %c0_i32_19 : i32
      %51 = vector.broadcast %50 : i1 to vector<1x128xi1>
      %52 = vector.broadcast %51 : vector<1x128xi1> to vector<1x128xi1>
      %53 = arith.xori %49, %52 : vector<1x128xi1>
      %54 = arith.andi %53, %47 : vector<1x128xi1>
      %55 = vector.broadcast %43 : i32 to vector<1x128xi32>
      %56 = arith.addi %45, %55 : vector<1x128xi32>
      %57 = arith.select %54, %56, %45 : vector<1x128xi1>, vector<1x128xi32>
      %c0_i32_20 = arith.constant 0 : i32
      %58 = vector.broadcast %c0_i32_20 : i32 to vector<1x128xi32>
      %59 = arith.cmpi eq, %57, %58 : vector<1x128xi32>
      %cst_21 = arith.constant 4.000000e+00 : f32
      %cst_22 = arith.constant 0x7F800000 : f32
      %60 = vector.broadcast %cst_21 : f32 to vector<1x128xf32>
      %61 = vector.broadcast %cst_22 : f32 to vector<1x128xf32>
      %62 = arith.select %59, %60, %61 : vector<1x128xi1>, vector<1x128xf32>
      %c0_23 = arith.constant 0 : index
      %c0_24 = arith.constant 0 : index
      %63 = vector.load %arg4[%c0_23, %c0_24] : memref<1x128xf32, #tpu.memory_space<vmem>>, vector<1x128xf32>
      tpu.vector_store %arg4[%c0_23, %c0_24], %62 {strides = array<i32>} : memref<1x128xf32, #tpu.memory_space<vmem>>, vector<1x128xf32>,
      %cst_25 = arith.constant 0.000000e+00 : f32
      %64 = vector.broadcast %cst_25 : f32 to vector<8x128xf32>
      %c0_26 = arith.constant 0 : index
      %c0_27 = arith.constant 0 : index
      %65 = vector.load %arg5[%c0_26, %c0_27] : memref<8x128xf32, #tpu.memory_space<vmem>>, vector<8x128xf32>
      tpu.vector_store %arg5[%c0_26, %c0_27], %64 {strides = array<i32>} : memref<8x128xf32, #tpu.memory_space<vmem>>, vector<8x128xf32>,
    } else {
    }
    %c1_i32 = arith.constant 1 : i32
    %3 = arith.muli %arg0, %c1_i32 : i32
    %4 = arith.addi %3, %arg1 : i32
    %c32_i32 = arith.constant 32 : i32
    %5 = arith.muli %4, %c32_i32 : i32
    %c0 = arith.constant 0 : index
    %c0_1 = arith.constant 0 : index
    %6 = vector.load %arg2[%c0, %c0_1] : memref<32x128xf32, #tpu.memory_space<vmem>>, vector<32x128xf32>
    %cst = arith.constant 5.000000e-01 : f32
    %7 = vector.broadcast %cst : f32 to vector<32x128xf32>
    %8 = arith.cmpf ogt, %6, %7 : vector<32x128xf32>
    %cst_2 = arith.constant 0.000000e+00 : f32
    %9 = vector.broadcast %cst_2 : f32 to vector<32x128xf32>
    %10 = arith.select %8, %6, %9 : vector<32x128xi1>, vector<32x128xf32>
    %11 = vector.extract_strided_slice %10 {offsets = [0, 1], sizes = [32, 127], strides = [1, 1]} : vector<32x128xf32> to vector<32x127xf32>
    %12 = vector.extract_strided_slice %10 {offsets = [0, 0], sizes = [32, 1], strides = [1, 1]} : vector<32x128xf32> to vector<32x1xf32>
    %13 = tpu.concatenate %11, %12 in 1 : vector<32x127xf32>, vector<32x1xf32> -> vector<32x128xf32>
    %14 = arith.addf %10, %13 : vector<32x128xf32>
    %15 = vector.extract_strided_slice %14 {offsets = [0, 2], sizes = [32, 126], strides = [1, 1]} : vector<32x128xf32> to vector<32x126xf32>
    %16 = vector.extract_strided_slice %14 {offsets = [0, 0], sizes = [32, 2], strides = [1, 1]} : vector<32x128xf32> to vector<32x2xf32>
    %17 = tpu.concatenate %15, %16 in 1 : vector<32x126xf32>, vector<32x2xf32> -> vector<32x128xf32>
    %18 = arith.addf %14, %17 : vector<32x128xf32>
    %19 = vector.extract_strided_slice %18 {offsets = [0, 4], sizes = [32, 124], strides = [1, 1]} : vector<32x128xf32> to vector<32x124xf32>
    %20 = vector.extract_strided_slice %18 {offsets = [0, 0], sizes = [32, 4], strides = [1, 1]} : vector<32x128xf32> to vector<32x4xf32>
    %21 = tpu.concatenate %19, %20 in 1 : vector<32x124xf32>, vector<32x4xf32> -> vector<32x128xf32>
    %22 = arith.addf %18, %21 : vector<32x128xf32>
    %c0_3 = arith.constant 0 : index
    %c0_4 = arith.constant 0 : index
    %23 = vector.load %arg4[%c0_3, %c0_4] : memref<1x128xf32, #tpu.memory_space<vmem>>, vector<1x128xf32>
    %24 = vector.broadcast %23 : vector<1x128xf32> to vector<32x128xf32>
    %25 = arith.subf %22, %24 : vector<32x128xf32>
    %cst_5 = arith.constant 0.000000e+00 : f32
    %26 = vector.broadcast %cst_5 : f32 to vector<32x128xf32>
    %27 = arith.maximumf %25, %26 : vector<32x128xf32>
    %c0_i32_6 = arith.constant 0 : i32
    %28 = arith.addi %5, %c0_i32_6 : i32
    %c32_i32_7 = arith.constant 32 : i32
    %29 = arith.subi %c32_i32_7, %28 : i32
    %c32_i32_8 = arith.constant 32 : i32
    %30 = arith.cmpi sge, %29, %c32_i32_8 : i32
    %31 = arith.extui %30 : i1 to i32
    %c0_i32_9 = arith.constant 0 : i32
    %32 = arith.cmpi ne, %31, %c0_i32_9 : i32
    scf.if %32 {
      %c0_15 = arith.constant 0 : index
      %c0_16 = arith.constant 0 : index
      %41 = vector.load %arg5[%c0_15, %c0_16] : memref<8x128xf32, #tpu.memory_space<vmem>>, vector<8x128xf32>
      %42 = vector.shape_cast %27 : vector<32x128xf32> to vector<4x8x128xf32>
      %cst_17 = arith.constant dense<0.000000e+00> : vector<8x128xf32>
      %43 = vector.multi_reduction <add>, %42, %cst_17 [0] : vector<4x8x128xf32> to vector<8x128xf32>
      %44 = arith.addf %41, %43 : vector<8x128xf32>
      %c0_18 = arith.constant 0 : index
      %c0_19 = arith.constant 0 : index
      %45 = vector.load %arg5[%c0_18, %c0_19] : memref<8x128xf32, #tpu.memory_space<vmem>>, vector<8x128xf32>
      tpu.vector_store %arg5[%c0_18, %c0_19], %44 {strides = array<i32>} : memref<8x128xf32, #tpu.memory_space<vmem>>, vector<8x128xf32>,
    } else {
    }
    %c0_i32_10 = arith.constant 0 : i32
    %33 = arith.cmpi sgt, %29, %c0_i32_10 : i32
    %c32_i32_11 = arith.constant 32 : i32
    %34 = arith.cmpi slt, %29, %c32_i32_11 : i32
    %35 = arith.andi %33, %34 : i1
    %36 = arith.extui %35 : i1 to i32
    %c0_i32_12 = arith.constant 0 : i32
    %37 = arith.cmpi ne, %36, %c0_i32_12 : i32
    scf.if %37 {
      %41 = tpu.iota {dimensions = array<i32: 0>} : vector<32x128xi32>
      %42 = vector.broadcast %29 : i32 to vector<32x128xi32>
      %43 = arith.cmpi slt, %41, %42 : vector<32x128xi32>
      %cst_15 = arith.constant 0.000000e+00 : f32
      %44 = vector.broadcast %cst_15 : f32 to vector<32x128xf32>
      %45 = arith.select %43, %27, %44 : vector<32x128xi1>, vector<32x128xf32>
      %c0_16 = arith.constant 0 : index
      %c0_17 = arith.constant 0 : index
      %46 = vector.load %arg5[%c0_16, %c0_17] : memref<8x128xf32, #tpu.memory_space<vmem>>, vector<8x128xf32>
      %47 = vector.shape_cast %45 : vector<32x128xf32> to vector<4x8x128xf32>
      %cst_18 = arith.constant dense<0.000000e+00> : vector<8x128xf32>
      %48 = vector.multi_reduction <add>, %47, %cst_18 [0] : vector<4x8x128xf32> to vector<8x128xf32>
      %49 = arith.addf %46, %48 : vector<8x128xf32>
      %c0_19 = arith.constant 0 : index
      %c0_20 = arith.constant 0 : index
      %50 = vector.load %arg5[%c0_19, %c0_20] : memref<8x128xf32, #tpu.memory_space<vmem>>, vector<8x128xf32>
      tpu.vector_store %arg5[%c0_19, %c0_20], %49 {strides = array<i32>} : memref<8x128xf32, #tpu.memory_space<vmem>>, vector<8x128xf32>,
    } else {
    }
    %c0_i32_13 = arith.constant 0 : i32
    %38 = arith.cmpi eq, %arg1, %c0_i32_13 : i32
    %39 = arith.extui %38 : i1 to i32
    %c0_i32_14 = arith.constant 0 : i32
    %40 = arith.cmpi ne, %39, %c0_i32_14 : i32
    scf.if %40 {
      %c0_15 = arith.constant 0 : index
      %c0_16 = arith.constant 0 : index
      %41 = vector.load %arg5[%c0_15, %c0_16] : memref<8x128xf32, #tpu.memory_space<vmem>>, vector<8x128xf32>
      %42 = vector.shape_cast %41 : vector<8x128xf32> to vector<1x8x128xf32>
      %cst_17 = arith.constant dense<0.000000e+00> : vector<1xf32>
      %43 = vector.multi_reduction <add>, %42, %cst_17 [1, 2] : vector<1x8x128xf32> to vector<1xf32>
      %44 = vector.shape_cast %43 : vector<1xf32> to vector<1x1x1xf32>
      %45 = vector.extract %44[0, 0, 0] : f32 from vector<1x1x1xf32>
      %46 = vector.broadcast %45 : f32 to vector<1x1xf32>
      %c0_18 = arith.constant 0 : index
      %c0_19 = arith.constant 0 : index
      %c0_20 = arith.constant 0 : index
      %47 = vector.load %arg3[%c0_18, %c0_19, %c0_20] : memref<1x1x1xf32, #tpu.memory_space<vmem>>, vector<1x1x1xf32>
      %48 = vector.shape_cast %47 : vector<1x1x1xf32> to vector<1x1xf32>
      %49 = vector.shape_cast %46 : vector<1x1xf32> to vector<1x1x1xf32>
      tpu.vector_store %arg3[%c0_18, %c0_19, %c0_20], %49 {strides = array<i32>} : memref<1x1x1xf32, #tpu.memory_space<vmem>>, vector<1x1x1xf32>,
    } else {
    }
    return
  }
  func.func @transform_0(%arg0: i32, %arg1: i32) -> (i32, i32) {
    %c1_i32 = arith.constant 1 : i32
    %0 = arith.muli %arg0, %c1_i32 : i32
    %1 = arith.addi %0, %arg1 : i32
    %c0_i32 = arith.constant 0 : i32
    %2 = arith.minsi %1, %c0_i32 : i32
    %c0_i32_0 = arith.constant 0 : i32
    %c0_i32_1 = arith.constant 0 : i32
    return %2, %c0_i32_0 : i32, i32
  }
  func.func @transform_1(%arg0: i32, %arg1: i32) -> (i32, i32, i32) {
    %c0_i32 = arith.constant 0 : i32
    %c0_i32_0 = arith.constant 0 : i32
    %c0_i32_1 = arith.constant 0 : i32
    return %arg0, %c0_i32, %c0_i32_0 : i32, i32, i32
  }
}

</mosaic_0001>

<llo_original>
// kernel: tpu_custom_call.1
$region0: #{tpu_custom_call.1}
  #allocation0 [shape = 'u32[]', space=smem, size = 0x4, offset = 0x4, fixed_abs, tag = 'smem constant byte address 0x4 - core index']
  #allocation1 [shape = 'u32[72,128]{1,0:T(1,128)}', space=vmem, size = 0x9000, scoped, tag = 'internal scratch']
  #allocation2 [shape = 'f32[1,128]{1,0:T(1,128)}', space=vmem, size = 0x200, scoped, tag = 'scratch operand']
  #allocation3 [shape = 'f32[8,128]{1,0:T(8,128)}', space=vmem, size = 0x1000, scoped, tag = 'scratch operand']
  %s0 = inlined_call_operand.hbm [shape: f32[32,128], index: 0, kind: input, shape index: {}]
  %s1 = inlined_call_operand.hbm [shape: f32[1,1,1], index: 1, kind: output, shape index: {}]
  %s2 = sld [smem:[#allocation0]]
  $region34: #{tpu_custom_call.1} parent=0
    _
  %s4 = ssub.s32 1, %s2
  %s5 = scalar_select 0, %s4, %s2
  $region1: #{tpu_custom_call.1} parent=0
    #allocation4 [shape = 'u8[16384]{0}', space=vmem, size = 0x4000, scoped, tag = 'input window, operand 0, single buffered']
    #allocation5 [shape = 's32[1]{0}', space=sflag, size = 0x4, scoped, tag = 'scoped memory for tpu_custom_call.1']
    #allocation6 [shape = 's32[1]{0}', space=sflag, size = 0x4, scoped, tag = 'scoped memory for tpu_custom_call.1']
    #allocation7 [shape = 'u8[512]{0}', space=vmem, size = 0x400, scoped, tag = 'output window, operand 0, single buffered']
    %6 = vsyncpa [#allocation5], 0
    %7 = vsyncpa [#allocation6], 0
    // Predicated region
    $region2: #{tpu_custom_call.1} parent=1 // pred_check
      _
    $region3: #{tpu_custom_call.1} parent=1 // pred_check_branch
      %9 = sbr.rel (0) target = $region5
    $region4: #{tpu_custom_call.1} parent=1 // pred_region
      %s10 = sadd.s32 0, 0
      %p11 = scmp.lt.s32.totalorder %s10, 0
      %s12 = scalar_select %p11, %s10, 0
      %s13 = smul.u32 4, %s12
      %15 = vsyncadd [#allocation5], 0
      %s16 = smul.addr %s13, 8
      %s17 = scalar_lea.hbm %s0, %s16
      %s18 = sshll.u32 %s17, 4
      %s19 = int_to_ptr.hbm [resolvable:$true] %s18
      %s20 = sshll.u32 [#allocation4], 4
      %s21 = int_to_ptr.vmem [resolvable:$true] %s20
      %26 = dma.hbm_to_vmem [thread:$0]  %s19, 512, %s21, [#allocation5], 128, 128, 8
    $region5: #{tpu_custom_call.1} parent=1 // pred_fallthru
      _
    // Predicated region
    $region6: #{tpu_custom_call.1} parent=1 // pred_check
      _
    $region7: #{tpu_custom_call.1} parent=1 // pred_check_branch
      %28 = sbr.rel (0) target = $region9
    $region8: #{tpu_custom_call.1} parent=1 // pred_region
      %30 = dma.done [#allocation5], 512
    $region9: #{tpu_custom_call.1} parent=1 // pred_fallthru
      _
    %s31 = sadd.s32 0, 0
    %p32 = scmp.lt.s32.totalorder %s31, 0
    %s33 = scalar_select %p32, %s31, 0
    %s34 = smul.u32 4, %s33
    %p35 = scmp.eq.s32.totalorder 0, 0
    // Predicated region
    $region10: #{tpu_custom_call.1} parent=1 // pred_check
      %p36 = pneg %p35
    $region11: #{tpu_custom_call.1} parent=1 // pred_check_branch
      %38 = sbr.rel (%p36) target = $region13
    $region12: #{tpu_custom_call.1} parent=1 // pred_region
      %v39 = vlaneseq
      %v40 = vand.u32 %v39, 127
      %vm41 = vcmp.lt.s32.totalorder %v40, 0
      %v42 = vsub.s32 0, %v40
      %v43 = vsel %vm41, %v42, %v40
      %v44 = vshrl.u32 %v43, 3
      %v45 = vand.u32 %v43, 7
      %v46 = vsub.s32 0, %v45
      %v47 = vsel %vm41, %v46, %v45
      %vm48 = vcmp.ne.s32.totalorder %v47, 0
      %vm49 = vcmp.lt.s32.totalorder %v47, 0
      %vm50 = vmand %vm49, %vm48
      %v51 = vadd.s32 %v47, 8
      %v52 = vsel %vm50, %v51, %v47
      %vm53 = vcmp.eq.s32.totalorder %v52, 0
      %v54 = vsel %vm53, 4.0, inf
      %55 = vst [vmem:[#allocation2] sm:$0x1] %v54
      %56 = vst [vmem:[#allocation3] sm:$0xff] 0.0
    $region13: #{tpu_custom_call.1} parent=1 // pred_fallthru
      _
    %s57 = sadd.s32 0, 0
    %s58 = smul.u32 %s57, 32
    %v59 = vld [vmem:[#allocation4] sm:$0xff]
    %v60 = vld [vmem:[#allocation4 + $0x8] sm:$0xff]
    %v61 = vld [vmem:[#allocation4 + $0x10] sm:$0xff]
    %v62 = vld [vmem:[#allocation4 + $0x18] sm:$0xff]
    %vm63 = vcmp.gt.f32.partialorder %v59, 0.5
    %vm64 = vcmp.gt.f32.partialorder %v60, 0.5
    %vm65 = vcmp.gt.f32.partialorder %v61, 0.5
    %vm66 = vcmp.gt.f32.partialorder %v62, 0.5
    %v67 = vsel %vm63, %v59, 0.0
    %v68 = vsel %vm64, %v60, 0.0
    %v69 = vsel %vm65, %v61, 0.0
    %v70 = vsel %vm66, %v62, 0.0
    %75 = vrot.lane.b32.xlu0 %v67, 127
    %v76 = vpop.permute.xlu0 %75
    %77 = vrot.lane.b32.xlu0 %v68, 127
    %v78 = vpop.permute.xlu0 %77
    %79 = vrot.lane.b32.xlu0 %v69, 127
    %v80 = vpop.permute.xlu0 %79
    %81 = vrot.lane.b32.xlu0 %v70, 127
    %v82 = vpop.permute.xlu0 %81
    %v87 = vadd.f32 %v67, %v76
    %v88 = vadd.f32 %v68, %v78
    %v89 = vadd.f32 %v69, %v80
    %v90 = vadd.f32 %v70, %v82
    %95 = vrot.lane.b32.xlu0 %v87, 126
    %v96 = vpop.permute.xlu0 %95
    %97 = vrot.lane.b32.xlu0 %v88, 126
    %v98 = vpop.permute.xlu0 %97
    %99 = vrot.lane.b32.xlu0 %v89, 126
    %v100 = vpop.permute.xlu0 %99
    %101 = vrot.lane.b32.xlu0 %v90, 126
    %v102 = vpop.permute.xlu0 %101
    %v107 = vadd.f32 %v87, %v96
    %v108 = vadd.f32 %v88, %v98
    %v109 = vadd.f32 %v89, %v100
    %v110 = vadd.f32 %v90, %v102
    %115 = vrot.lane.b32.xlu0 %v107, 124
    %v116 = vpop.permute.xlu0 %115
    %117 = vrot.lane.b32.xlu0 %v108, 124
    %v118 = vpop.permute.xlu0 %117
    %119 = vrot.lane.b32.xlu0 %v109, 124
    %v120 = vpop.permute.xlu0 %119
    %121 = vrot.lane.b32.xlu0 %v110, 124
    %v122 = vpop.permute.xlu0 %121
    %v127 = vadd.f32 %v107, %v116
    %v128 = vadd.f32 %v108, %v118
    %v129 = vadd.f32 %v109, %v120
    %v130 = vadd.f32 %v110, %v122
    %v131 = vld [vmem:[#allocation2] sm:$0x1]
    %v133 = vperm.slane %v131, 0
    %v135 = vsub.f32 %v127, %v133
    %v136 = vsub.f32 %v128, %v133
    %v137 = vsub.f32 %v129, %v133
    %v138 = vsub.f32 %v130, %v133
    %v139 = vmax.f32 %v135, 0.0
    %v140 = vmax.f32 %v136, 0.0
    %v141 = vmax.f32 %v137, 0.0
    %v142 = vmax.f32 %v138, 0.0
    %s143 = ssub.s32 32, %s58
    %p144 = scmp.ge.s32.totalorder %s143, 32
    // Predicated region
    $region14: #{tpu_custom_call.1} parent=1 // pred_check
      %p145 = pneg %p144
    $region15: #{tpu_custom_call.1} parent=1 // pred_check_branch
      %147 = sbr.rel (%p145) target = $region17
    $region16: #{tpu_custom_call.1} parent=1 // pred_region
      %v148 = vld [vmem:[#allocation3] sm:$0xff]
      %v149 = vadd.f32 %v139, %v140
      %v150 = vadd.f32 %v149, %v141
      %v151 = vadd.f32 %v150, %v142
      %v152 = vadd.f32 %v148, %v151
      %153 = vst [vmem:[#allocation3] sm:$0xff] %v152
    $region17: #{tpu_custom_call.1} parent=1 // pred_fallthru
      _
    %p154 = scmp.gt.s32.totalorder %s143, 0
    %p155 = scmp.lt.s32.totalorder %s143, 32
    %p156 = pnand %p154, %p155
    %p157 = pneg %p156
    // Predicated region
    $region18: #{tpu_custom_call.1} parent=1 // pred_check
      _
    $region19: #{tpu_custom_call.1} parent=1 // pred_check_branch
      %159 = sbr.rel (%p156) target = $region21
    $region20: #{tpu_custom_call.1} parent=1 // pred_region
      %v160 = vlaneseq
      %v161 = vshrl.u32 %v160, 7
      %v162 = vadd.s32 %v161, 8
      %v163 = vadd.s32 %v161, 16
      %v164 = vadd.s32 %v161, 24
      %v165 = vstv %s143
      %vm166 = vcmp.lt.s32.totalorder %v161, %v165
      %vm167 = vcmp.lt.s32.totalorder %v162, %v165
      %vm168 = vcmp.lt.s32.totalorder %v163, %v165
      %vm169 = vcmp.lt.s32.totalorder %v164, %v165
      %v170 = vsel %vm166, %v139, 0.0
      %v171 = vsel %vm167, %v140, 0.0
      %v172 = vsel %vm168, %v141, 0.0
      %v173 = vsel %vm169, %v142, 0.0
      %v174 = vld [vmem:[#allocation3] sm:$0xff]
      %v175 = vadd.f32 %v170, %v171
      %v176 = vadd.f32 %v175, %v172
      %v177 = vadd.f32 %v176, %v173
      %v178 = vadd.f32 %v174, %v177
      %179 = vst [vmem:[#allocation3] sm:$0xff] %v178
    $region21: #{tpu_custom_call.1} parent=1 // pred_fallthru
      _
    // Predicated region
    $region22: #{tpu_custom_call.1} parent=1 // pred_check
      %p180 = pneg %p35
    $region23: #{tpu_custom_call.1} parent=1 // pred_check_branch
      %182 = sbr.rel (%p180) target = $region25
    $region24: #{tpu_custom_call.1} parent=1 // pred_region
      %v183 = vld [vmem:[#allocation3] sm:$0xff]
      %184 = vadd.xlane.f32.xlu0 %v183
      %v185 = vpop.xlane.xlu0 %184
      %v186 = vrot.slane %v185, 4
      %v187 = vadd.f32 %v185, %v186
      %v188 = vrot.slane %v187, 2
      %v189 = vadd.f32 %v187, %v188
      %v190 = vrot.slane %v189, 1
      %v191 = vadd.f32 %v189, %v190
      %s192 = vtos %v191
      %v193 = vstv %s192
      %vm194 = vcmask 0
      %195 = vst.msk [vmem:[#allocation7] sm:$0x1] %vm194, %v193
    $region25: #{tpu_custom_call.1} parent=1 // pred_fallthru
      _
    // Predicated region
    $region26: #{tpu_custom_call.1} parent=1 // pred_check
      _
    $region27: #{tpu_custom_call.1} parent=1 // pred_check_branch
      %197 = sbr.rel (0) target = $region29
    $region28: #{tpu_custom_call.1} parent=1 // pred_region
      %199 = vsyncadd [#allocation6], 0
      %s201 = sshll.u32 [#allocation7], 4
      %s202 = int_to_ptr.vmem [resolvable:$true] %s201
      %s203 = sshll.u32 %s1, 4
      %s204 = int_to_ptr.hbm [resolvable:$true] %s203
      %206 = dma.vmem_to_hbm [thread:$0]  %s202, 16, %s204, [#allocation6]
    $region29: #{tpu_custom_call.1} parent=1 // pred_fallthru
      _
    // Predicated region
    $region30: #{tpu_custom_call.1} parent=1 // pred_check
      _
    $region31: #{tpu_custom_call.1} parent=1 // pred_check_branch
      %208 = sbr.rel (0) target = $region33
    $region32: #{tpu_custom_call.1} parent=1 // pred_region
      %210 = dma.done [#allocation6], 16
    $region33: #{tpu_custom_call.1} parent=1 // pred_fallthru
      _
    %211 = vsyncpa [#allocation5], 1
    %212 = vsyncpa [#allocation6], 1

</llo_original>
